<compile_context>
chip_gen: v7x
topology: tpu7x:2x2x1
jax: 0.10.0
libtpu: 0.0.40
codegen_flags: <defaults>
</compile_context>

<pallas_src>
import jax
import jax.numpy as jnp
from jax import lax
from jax.experimental import pallas as pl
from jax.experimental.pallas import tpu as pltpu

_LANE = 128


def _round_up(x, m):
    return (x + m - 1) // m * m


def _min_sublanes(dtype):
    # Native sublane packing: f32 -> 8, bf16 -> 16, int8/fp8 -> 32.
    return max(8, 32 // jnp.dtype(dtype).itemsize)


def _make_dice_kernel(hw, s_chunk, s_per_shard):
    def kernel(pred_ref, tgt_ref, inter_ref, card_ref):
        s = pl.program_id(2)

        @pl.when(s == 0)
        def _init():
            inter_ref[...] = jnp.zeros_like(inter_ref)
            card_ref[...] = jnp.zeros_like(card_ref)

        shard = pl.program_id(0)
        # Element offset of this *logical* spatial chunk.  For shard-overrun
        # chunks (odd chunk counts) base >= hw and the mask zeroes everything,
        # even though the DMA (clamped in the index_map) re-read a valid chunk.
        base = (shard * s_per_shard + s) * s_chunk

        def accumulate(p, t):
            # (B, 1) row sums broadcast into the lane-dense accumulators; the
            # wrapper reads lane 0.  Cardinality is fused: sum(p + t).
            inter_ref[...] += jnp.sum(p * t, axis=1, keepdims=True)
            card_ref[...] += jnp.sum(p + t, axis=1, keepdims=True)

        full = base + s_chunk <= hw

        @pl.when(full)
        def _full_chunk():  # fast path: no masking at all
            accumulate(pred_ref[...].astype(jnp.float32),
                       tgt_ref[...].astype(jnp.float32))

        @pl.when(jnp.logical_not(full))
        def _tail_chunk():  # ragged tail (and shard overrun): mask lanes >= hw
            col = lax.broadcasted_iota(jnp.int32, (1, s_chunk), 1) + base
            valid = col < hw  # (1, s_chunk), broadcast over rows
            accumulate(jnp.where(valid, pred_ref[...].astype(jnp.float32), 0.0),
                       jnp.where(valid, tgt_ref[...].astype(jnp.float32), 0.0))

    return kernel


def binary_dice_loss(prediction, target, reduction: str = "mean",
                     *, block_bytes: int = 2 * 1024 * 1024):
    """Pallas TPU implementation of BinaryDiceLoss.forward."""
    assert prediction.shape == target.shape and prediction.ndim == 3
    n, h, w = prediction.shape
    hw = h * w

    # Lane-dense layout: flatten spatial dims outside the kernel (free reshape,
    # no data movement beyond what XLA already needs).
    pred2 = prediction.reshape(n, hw)
    tgt2 = target.reshape(n, hw)

    # Row-block granularity follows the narrower dtype's sublane packing.
    min_sub = max(_min_sublanes(prediction.dtype), _min_sublanes(target.dtype))

    # Budget in f32-equivalent elements per input so the in-kernel f32 upcast
    # temporaries are accounted for (matters on v7x's 64 MiB / 32 MiB scoped VMEM).
    budget_elems = max(block_bytes // 4, min_sub * _LANE)
    hw_lane = _round_up(hw, _LANE)

    if hw_lane * min_sub <= budget_elems:
        # Small/medium images: pack several samples per block, one spatial chunk.
        b_rows = (budget_elems // hw_lane) // min_sub * min_sub
        b_rows = max(min_sub, min(b_rows, _round_up(n, min_sub)))
        s_chunk = hw_lane
    else:
        # Large images: minimum row block, chunk the spatial axis.
        b_rows = min_sub
        s_chunk = max(_LANE, (budget_elems // b_rows) // _LANE * _LANE)

    n_chunks = pl.cdiv(hw, s_chunk)
    n_batch_blocks = pl.cdiv(n, b_rows)

    # v7x: if the batch axis alone cannot feed both TensorCores, shard the
    # spatial reduction across a leading parallel axis (no-op cost on v5e/v6e).
    n_shards = 2 if (n_batch_blocks == 1 and n_chunks >= 2) else 1
    s_per_shard = pl.cdiv(n_chunks, n_shards)

    grid = (n_shards, n_batch_blocks, s_per_shard)
    n_rows = n_batch_blocks * b_rows
    total_steps = n_shards * n_batch_blocks * s_per_shard

    def in_index_map(shard, bi, si):
        chunk = shard * s_per_shard + si
        # Clamp so the DMA never addresses past the array; overrun chunks are
        # zeroed in-kernel (the kernel recomputes the *unclamped* offset).
        return (bi, jnp.minimum(chunk, n_chunks - 1))

    def out_index_map(shard, bi, si):
        return (shard, bi, 0)

    def make_in_spec(dtype):
        blk = (b_rows, s_chunk)
        # Deepen input pipelining for small chunks (exposed DMA latency /
        # per-step overhead); skip when the grid is too short to benefit.
        small = (b_rows * s_chunk * jnp.dtype(dtype).itemsize <= 512 * 1024
                 and total_steps >= 3)
        if small and hasattr(pl, "Buffered"):
            try:
                return pl.BlockSpec(blk, in_index_map,
                                    pipeline_mode=pl.Buffered(3))
            except TypeError:
                pass
        return pl.BlockSpec(blk, in_index_map)

    out_spec = pl.BlockSpec((None, b_rows, _LANE), out_index_map)
    out_sds = jax.ShapeDtypeStruct((n_shards, n_rows, _LANE), jnp.float32)

    inter_out, card_out = pl.pallas_call(
        _make_dice_kernel(hw, s_chunk, s_per_shard),
        out_shape=(out_sds, out_sds),
        grid_spec=pltpu.PrefetchScalarGridSpec(
            num_scalar_prefetch=0,
            grid=grid,
            in_specs=[make_in_spec(prediction.dtype),
                      make_in_spec(target.dtype)],
            out_specs=[out_spec, out_spec],
        ),
        compiler_params=pltpu.CompilerParams(
            dimension_semantics=("parallel", "parallel", "arbitrary"),
            vmem_limit_bytes=32 * 1024 * 1024,
        ),
    )(pred2, tgt2)

    # Rows >= n come from clamped edge blocks (garbage partial sums, possibly
    # NaN) -> slice BEFORE any reduction.  Keep this invariant.
    intersection = inter_out[:, :n, 0].sum(axis=0)
    cardinality = card_out[:, :n, 0].sum(axis=0)
    # Exact module semantics: no smooth term.
    loss = 1.0 - 2.0 * (intersection / cardinality)

    if reduction == "mean":
        return loss.mean()
    elif reduction == "sum":
        return loss.sum()
    else:
        raise NotImplementedError


def _reference(prediction, target, reduction="mean"):
    # Pure-JAX reference mirroring the PyTorch forward exactly (f32 math).
    prediction = prediction.astype(jnp.float32)
    target = target.astype(jnp.float32)
    intersection = jnp.sum(prediction * target, axis=(1, 2))
    cardinality = jnp.sum(prediction, axis=(1, 2)) + jnp.sum(target, axis=(1, 2))
    loss = 1.0 - 2.0 * (intersection / cardinality)
    return loss.mean() if reduction == "mean" else loss.sum()


def _make_inputs(key, shape, dtype=jnp.float32):
    k1, k2 = jax.random.split(key)
    prediction = jax.nn.sigmoid(jax.random.normal(k1, shape, dtype=jnp.float32))
    target = (jax.random.uniform(k2, shape) > 0.5).astype(jnp.float32)
    return prediction.astype(dtype), target.astype(dtype)


if __name__ == "__main__":
    key = jax.random.PRNGKey(0)
    k0, k1, k2, k3 = jax.random.split(key, 4)

    # 1) Module-typical small input (lane-aligned), mean reduction.
    p, t = _make_inputs(k0, (2, 16, 16))
    out = jax.block_until_ready(binary_dice_loss(p, t, reduction="mean"))
    ref = _reference(p, t, reduction="mean")
    assert jnp.allclose(out, ref, rtol=1e-5, atol=1e-5), (out, ref)

    # 2) Unaligned N and H*W (in-kernel tail mask, no padding), sum reduction.
    p, t = _make_inputs(k1, (5, 20, 25))
    out = jax.block_until_ready(binary_dice_loss(p, t, reduction="sum"))
    ref = _reference(p, t, reduction="sum")
    assert jnp.allclose(out, ref, rtol=1e-5, atol=1e-5), (out, ref)

    # 3) bf16 inputs + small block budget: chunked spatial axis, 16-row blocks,
    #    two spatial shards (v7x dual-TC path), deep input buffering, tail mask.
    p, t = _make_inputs(k2, (2, 60, 60), dtype=jnp.bfloat16)
    out = jax.block_until_ready(
        binary_dice_loss(p, t, reduction="mean", block_bytes=64 * 1024))
    ref = _reference(p, t, reduction="mean")
    assert jnp.allclose(out, ref, rtol=1e-4, atol=1e-4), (out, ref)

    # 4) Default configuration, lane-aligned spatial size, single chunk.
    p, t = _make_inputs(k3, (3, 128, 128))
    out = jax.block_until_ready(binary_dice_loss(p, t, reduction="mean"))
    ref = _reference(p, t, reduction="mean")
    assert jnp.allclose(out, ref, rtol=1e-5, atol=1e-5), (out, ref)

    print("KERNEL_OK")
</pallas_src>

<mosaic_0001>
module attributes {stable_mosaic.version = 11 : i64} {
  func.func @kernel(%arg0: i32, %arg1: i32, %arg2: i32, %arg3: memref<8x256xf32, #tpu.memory_space<vmem>>, %arg4: memref<8x256xf32, #tpu.memory_space<vmem>>, %arg5: memref<1x8x128xf32, #tpu.memory_space<vmem>>, %arg6: memref<1x8x128xf32, #tpu.memory_space<vmem>>) attributes {dimension_semantics = [#tpu.dimension_semantics<parallel>, #tpu.dimension_semantics<parallel>, #tpu.dimension_semantics<arbitrary>], iteration_bounds = array<i64: 1, 1, 1>, scalar_prefetch = 0 : i64, scratch_operands = 0 : i64, tpu.core_type = #tpu.core_type<tc>, window_params = [{transform_indices = @transform_0, window_bounds = array<i64: 8, 256>}, {transform_indices = @transform_1, window_bounds = array<i64: 8, 256>}, {transform_indices = @transform_2, window_bounds = array<i64: 1, 8, 128>}, {transform_indices = @transform_3, window_bounds = array<i64: 1, 8, 128>}]} {
    %c0_i32 = arith.constant 0 : i32
    %0 = arith.cmpi eq, %arg2, %c0_i32 : i32
    %1 = arith.extui %0 : i1 to i32
    %c0_i32_0 = arith.constant 0 : i32
    %2 = arith.cmpi ne, %1, %c0_i32_0 : i32
    scf.if %2 {
      %cst = arith.constant 0.000000e+00 : f32
      %13 = vector.broadcast %cst : f32 to vector<8x128xf32>
      %c0 = arith.constant 0 : index
      %c0_5 = arith.constant 0 : index
      %c0_6 = arith.constant 0 : index
      %14 = vector.load %arg5[%c0, %c0_5, %c0_6] : memref<1x8x128xf32, #tpu.memory_space<vmem>>, vector<1x8x128xf32>
      %15 = vector.shape_cast %14 : vector<1x8x128xf32> to vector<8x128xf32>
      %16 = vector.shape_cast %13 : vector<8x128xf32> to vector<1x8x128xf32>
      tpu.vector_store %arg5[%c0, %c0_5, %c0_6], %16 {strides = array<i32>} : memref<1x8x128xf32, #tpu.memory_space<vmem>>, vector<1x8x128xf32>,
      %cst_7 = arith.constant 0.000000e+00 : f32
      %17 = vector.broadcast %cst_7 : f32 to vector<8x128xf32>
      %c0_8 = arith.constant 0 : index
      %c0_9 = arith.constant 0 : index
      %c0_10 = arith.constant 0 : index
      %18 = vector.load %arg6[%c0_8, %c0_9, %c0_10] : memref<1x8x128xf32, #tpu.memory_space<vmem>>, vector<1x8x128xf32>
      %19 = vector.shape_cast %18 : vector<1x8x128xf32> to vector<8x128xf32>
      %20 = vector.shape_cast %17 : vector<8x128xf32> to vector<1x8x128xf32>
      tpu.vector_store %arg6[%c0_8, %c0_9, %c0_10], %20 {strides = array<i32>} : memref<1x8x128xf32, #tpu.memory_space<vmem>>, vector<1x8x128xf32>,
    } else {
    }
    %c1_i32 = arith.constant 1 : i32
    %3 = arith.muli %arg0, %c1_i32 : i32
    %4 = arith.addi %3, %arg2 : i32
    %c256_i32 = arith.constant 256 : i32
    %5 = arith.muli %4, %c256_i32 : i32
    %c256_i32_1 = arith.constant 256 : i32
    %6 = arith.addi %5, %c256_i32_1 : i32
    %c256_i32_2 = arith.constant 256 : i32
    %7 = arith.cmpi sle, %6, %c256_i32_2 : i32
    %8 = arith.extui %7 : i1 to i32
    %c0_i32_3 = arith.constant 0 : i32
    %9 = arith.cmpi ne, %8, %c0_i32_3 : i32
    scf.if %9 {
      %c0 = arith.constant 0 : index
      %c0_5 = arith.constant 0 : index
      %13 = vector.load %arg3[%c0, %c0_5] : memref<8x256xf32, #tpu.memory_space<vmem>>, vector<8x256xf32>
      %c0_6 = arith.constant 0 : index
      %c0_7 = arith.constant 0 : index
      %14 = vector.load %arg4[%c0_6, %c0_7] : memref<8x256xf32, #tpu.memory_space<vmem>>, vector<8x256xf32>
      %c0_8 = arith.constant 0 : index
      %c0_9 = arith.constant 0 : index
      %c0_10 = arith.constant 0 : index
      %15 = vector.load %arg5[%c0_8, %c0_9, %c0_10] : memref<1x8x128xf32, #tpu.memory_space<vmem>>, vector<1x8x128xf32>
      %16 = vector.shape_cast %15 : vector<1x8x128xf32> to vector<8x128xf32>
      %17 = arith.mulf %13, %14 : vector<8x256xf32>
      %cst = arith.constant dense<0.000000e+00> : vector<8xf32>
      %18 = vector.multi_reduction <add>, %17, %cst [1] : vector<8x256xf32> to vector<8xf32>
      %19 = vector.shape_cast %18 : vector<8xf32> to vector<8x1xf32>
      %20 = vector.broadcast %19 : vector<8x1xf32> to vector<8x128xf32>
      %21 = arith.addf %16, %20 : vector<8x128xf32>
      %c0_11 = arith.constant 0 : index
      %c0_12 = arith.constant 0 : index
      %c0_13 = arith.constant 0 : index
      %22 = vector.load %arg5[%c0_11, %c0_12, %c0_13] : memref<1x8x128xf32, #tpu.memory_space<vmem>>, vector<1x8x128xf32>
      %23 = vector.shape_cast %22 : vector<1x8x128xf32> to vector<8x128xf32>
      %24 = vector.shape_cast %21 : vector<8x128xf32> to vector<1x8x128xf32>
      tpu.vector_store %arg5[%c0_11, %c0_12, %c0_13], %24 {strides = array<i32>} : memref<1x8x128xf32, #tpu.memory_space<vmem>>, vector<1x8x128xf32>,
      %c0_14 = arith.constant 0 : index
      %c0_15 = arith.constant 0 : index
      %c0_16 = arith.constant 0 : index
      %25 = vector.load %arg6[%c0_14, %c0_15, %c0_16] : memref<1x8x128xf32, #tpu.memory_space<vmem>>, vector<1x8x128xf32>
      %26 = vector.shape_cast %25 : vector<1x8x128xf32> to vector<8x128xf32>
      %27 = arith.addf %13, %14 : vector<8x256xf32>
      %cst_17 = arith.constant dense<0.000000e+00> : vector<8xf32>
      %28 = vector.multi_reduction <add>, %27, %cst_17 [1] : vector<8x256xf32> to vector<8xf32>
      %29 = vector.shape_cast %28 : vector<8xf32> to vector<8x1xf32>
      %30 = vector.broadcast %29 : vector<8x1xf32> to vector<8x128xf32>
      %31 = arith.addf %26, %30 : vector<8x128xf32>
      %c0_18 = arith.constant 0 : index
      %c0_19 = arith.constant 0 : index
      %c0_20 = arith.constant 0 : index
      %32 = vector.load %arg6[%c0_18, %c0_19, %c0_20] : memref<1x8x128xf32, #tpu.memory_space<vmem>>, vector<1x8x128xf32>
      %33 = vector.shape_cast %32 : vector<1x8x128xf32> to vector<8x128xf32>
      %34 = vector.shape_cast %31 : vector<8x128xf32> to vector<1x8x128xf32>
      tpu.vector_store %arg6[%c0_18, %c0_19, %c0_20], %34 {strides = array<i32>} : memref<1x8x128xf32, #tpu.memory_space<vmem>>, vector<1x8x128xf32>,
    } else {
    }
    %true = arith.constant true
    %10 = arith.xori %7, %true : i1
    %11 = arith.extui %10 : i1 to i32
    %c0_i32_4 = arith.constant 0 : i32
    %12 = arith.cmpi ne, %11, %c0_i32_4 : i32
    scf.if %12 {
      %13 = tpu.iota {dimensions = array<i32: 1>} : vector<1x256xi32>
      %14 = vector.broadcast %5 : i32 to vector<1x256xi32>
      %15 = arith.addi %13, %14 : vector<1x256xi32>
      %c256_i32_5 = arith.constant 256 : i32
      %16 = vector.broadcast %c256_i32_5 : i32 to vector<1x256xi32>
      %17 = arith.cmpi slt, %15, %16 : vector<1x256xi32>
      %c0 = arith.constant 0 : index
      %c0_6 = arith.constant 0 : index
      %18 = vector.load %arg3[%c0, %c0_6] : memref<8x256xf32, #tpu.memory_space<vmem>>, vector<8x256xf32>
      %cst = arith.constant 0.000000e+00 : f32
      %19 = vector.shape_cast %17 : vector<1x256xi1> to vector<1x256xi1>
      %20 = vector.broadcast %19 : vector<1x256xi1> to vector<8x256xi1>
      %21 = vector.broadcast %cst : f32 to vector<8x256xf32>
      %22 = arith.select %20, %18, %21 : vector<8x256xi1>, vector<8x256xf32>
      %c0_7 = arith.constant 0 : index
      %c0_8 = arith.constant 0 : index
      %23 = vector.load %arg4[%c0_7, %c0_8] : memref<8x256xf32, #tpu.memory_space<vmem>>, vector<8x256xf32>
      %cst_9 = arith.constant 0.000000e+00 : f32
      %24 = vector.shape_cast %17 : vector<1x256xi1> to vector<1x256xi1>
      %25 = vector.broadcast %24 : vector<1x256xi1> to vector<8x256xi1>
      %26 = vector.broadcast %cst_9 : f32 to vector<8x256xf32>
      %27 = arith.select %25, %23, %26 : vector<8x256xi1>, vector<8x256xf32>
      %c0_10 = arith.constant 0 : index
      %c0_11 = arith.constant 0 : index
      %c0_12 = arith.constant 0 : index
      %28 = vector.load %arg5[%c0_10, %c0_11, %c0_12] : memref<1x8x128xf32, #tpu.memory_space<vmem>>, vector<1x8x128xf32>
      %29 = vector.shape_cast %28 : vector<1x8x128xf32> to vector<8x128xf32>
      %30 = arith.mulf %22, %27 : vector<8x256xf32>
      %cst_13 = arith.constant dense<0.000000e+00> : vector<8xf32>
      %31 = vector.multi_reduction <add>, %30, %cst_13 [1] : vector<8x256xf32> to vector<8xf32>
      %32 = vector.shape_cast %31 : vector<8xf32> to vector<8x1xf32>
      %33 = vector.broadcast %32 : vector<8x1xf32> to vector<8x128xf32>
      %34 = arith.addf %29, %33 : vector<8x128xf32>
      %c0_14 = arith.constant 0 : index
      %c0_15 = arith.constant 0 : index
      %c0_16 = arith.constant 0 : index
      %35 = vector.load %arg5[%c0_14, %c0_15, %c0_16] : memref<1x8x128xf32, #tpu.memory_space<vmem>>, vector<1x8x128xf32>
      %36 = vector.shape_cast %35 : vector<1x8x128xf32> to vector<8x128xf32>
      %37 = vector.shape_cast %34 : vector<8x128xf32> to vector<1x8x128xf32>
      tpu.vector_store %arg5[%c0_14, %c0_15, %c0_16], %37 {strides = array<i32>} : memref<1x8x128xf32, #tpu.memory_space<vmem>>, vector<1x8x128xf32>,
      %c0_17 = arith.constant 0 : index
      %c0_18 = arith.constant 0 : index
      %c0_19 = arith.constant 0 : index
      %38 = vector.load %arg6[%c0_17, %c0_18, %c0_19] : memref<1x8x128xf32, #tpu.memory_space<vmem>>, vector<1x8x128xf32>
      %39 = vector.shape_cast %38 : vector<1x8x128xf32> to vector<8x128xf32>
      %40 = arith.addf %22, %27 : vector<8x256xf32>
      %cst_20 = arith.constant dense<0.000000e+00> : vector<8xf32>
      %41 = vector.multi_reduction <add>, %40, %cst_20 [1] : vector<8x256xf32> to vector<8xf32>
      %42 = vector.shape_cast %41 : vector<8xf32> to vector<8x1xf32>
      %43 = vector.broadcast %42 : vector<8x1xf32> to vector<8x128xf32>
      %44 = arith.addf %39, %43 : vector<8x128xf32>
      %c0_21 = arith.constant 0 : index
      %c0_22 = arith.constant 0 : index
      %c0_23 = arith.constant 0 : index
      %45 = vector.load %arg6[%c0_21, %c0_22, %c0_23] : memref<1x8x128xf32, #tpu.memory_space<vmem>>, vector<1x8x128xf32>
      %46 = vector.shape_cast %45 : vector<1x8x128xf32> to vector<8x128xf32>
      %47 = vector.shape_cast %44 : vector<8x128xf32> to vector<1x8x128xf32>
      tpu.vector_store %arg6[%c0_21, %c0_22, %c0_23], %47 {strides = array<i32>} : memref<1x8x128xf32, #tpu.memory_space<vmem>>, vector<1x8x128xf32>,
    } else {
    }
    return
  }
  func.func @transform_0(%arg0: i32, %arg1: i32, %arg2: i32) -> (i32, i32) {
    %c1_i32 = arith.constant 1 : i32
    %0 = arith.muli %arg0, %c1_i32 : i32
    %1 = arith.addi %0, %arg2 : i32
    %c0_i32 = arith.constant 0 : i32
    %2 = arith.minsi %1, %c0_i32 : i32
    %c0_i32_0 = arith.constant 0 : i32
    return %arg1, %2 : i32, i32
  }
  func.func @transform_1(%arg0: i32, %arg1: i32, %arg2: i32) -> (i32, i32) {
    %c1_i32 = arith.constant 1 : i32
    %0 = arith.muli %arg0, %c1_i32 : i32
    %1 = arith.addi %0, %arg2 : i32
    %c0_i32 = arith.constant 0 : i32
    %2 = arith.minsi %1, %c0_i32 : i32
    %c0_i32_0 = arith.constant 0 : i32
    return %arg1, %2 : i32, i32
  }
  func.func @transform_2(%arg0: i32, %arg1: i32, %arg2: i32) -> (i32, i32, i32) {
    %c0_i32 = arith.constant 0 : i32
    %c0_i32_0 = arith.constant 0 : i32
    return %arg0, %arg1, %c0_i32 : i32, i32, i32
  }
  func.func @transform_3(%arg0: i32, %arg1: i32, %arg2: i32) -> (i32, i32, i32) {
    %c0_i32 = arith.constant 0 : i32
    %c0_i32_0 = arith.constant 0 : i32
    return %arg0, %arg1, %c0_i32 : i32, i32, i32
  }
}

</mosaic_0001>

<llo_original>
// kernel: tpu_custom_call.1
$region0: #{tpu_custom_call.1}
  #allocation0 [shape = 'u32[]', space=smem, size = 0x4, offset = 0x4, fixed_abs, tag = 'smem constant byte address 0x4 - core index']
  #allocation1 [shape = 'u32[144,128]{1,0:T(1,128)}', space=vmem, size = 0x12000, scoped, tag = 'internal scratch']
  %s0 = inlined_call_operand.hbm [shape: f32[2,256], index: 0, kind: input, shape index: {}]
  %s1 = inlined_call_operand.hbm [shape: f32[2,256], index: 1, kind: input, shape index: {}]
  %s2 = inlined_call_operand.hbm [shape: f32[1,8,128], index: 2, kind: output, shape index: {0}]
  %s3 = inlined_call_operand.hbm [shape: f32[1,8,128], index: 3, kind: output, shape index: {1}]
  %4 = xla_tuple %s2, %s3
  %s5 = sld [smem:[#allocation0]]
  $region46: #{tpu_custom_call.1} parent=0
    _
  %s7 = ssub.s32 1, %s5
  %s8 = scalar_select 0, %s7, %s5
  $region1: #{tpu_custom_call.1} parent=0
    #allocation2 [shape = 'u8[8192]{0}', space=vmem, size = 0x2000, scoped, tag = 'input window, operand 0, single buffered']
    #allocation3 [shape = 's32[1]{0}', space=sflag, size = 0x4, scoped, tag = 'scoped memory for tpu_custom_call.1']
    #allocation4 [shape = 's32[1]{0}', space=sflag, size = 0x4, scoped, tag = 'scoped memory for tpu_custom_call.1']
    #allocation5 [shape = 'u8[8192]{0}', space=vmem, size = 0x2000, scoped, tag = 'input window, operand 1, single buffered']
    #allocation6 [shape = 's32[1]{0}', space=sflag, size = 0x4, scoped, tag = 'scoped memory for tpu_custom_call.1']
    #allocation7 [shape = 'u8[4096]{0}', space=vmem, size = 0x1000, scoped, tag = 'output window, operand 0, single buffered']
    #allocation8 [shape = 'u8[4096]{0}', space=vmem, size = 0x1000, scoped, tag = 'output window, operand 1, single buffered']
    #allocation9 [shape = 's32[1]{0}', space=sflag, size = 0x4, scoped, tag = 'scoped memory for tpu_custom_call.1']
    %9 = vsyncpa [#allocation3], 0
    %10 = vsyncpa [#allocation6], 0
    %11 = vsyncpa [#allocation4], 0
    %12 = vsyncpa [#allocation9], 0
    // Predicated region
    $region2: #{tpu_custom_call.1} parent=1 // pred_check
      _
    $region3: #{tpu_custom_call.1} parent=1 // pred_check_branch
      %14 = sbr.rel (0) target = $region5
    $region4: #{tpu_custom_call.1} parent=1 // pred_region
      %s15 = sadd.s32 0, 0
      %p16 = scmp.lt.s32.totalorder %s15, 0
      %s17 = scalar_select %p16, %s15, 0
      %s18 = smul.u32 2, %s17
      %s20 = ssub.s32 256, 64
      %21 = vsyncadd [#allocation3], %s20
      %s22 = smul.addr %s18, 32
      %s23 = scalar_lea.hbm %s0, %s22
      %s24 = sshll.u32 [#allocation2], 4
      %s25 = int_to_ptr.vmem [resolvable:$true] %s24
      %30 = dma.hbm_to_vmem [thread:$0]  %s23, 64, %s25, [#allocation3], 64, 64, 4
    $region5: #{tpu_custom_call.1} parent=1 // pred_fallthru
      _
    // Predicated region
    $region6: #{tpu_custom_call.1} parent=1 // pred_check
      _
    $region7: #{tpu_custom_call.1} parent=1 // pred_check_branch
      %32 = sbr.rel (0) target = $region9
    $region8: #{tpu_custom_call.1} parent=1 // pred_region
      %s33 = sadd.s32 0, 0
      %p34 = scmp.lt.s32.totalorder %s33, 0
      %s35 = scalar_select %p34, %s33, 0
      %s36 = smul.u32 2, %s35
      %s38 = ssub.s32 256, 64
      %39 = vsyncadd [#allocation6], %s38
      %s40 = smul.addr %s36, 32
      %s41 = scalar_lea.hbm %s1, %s40
      %s42 = sshll.u32 [#allocation5], 4
      %s43 = int_to_ptr.vmem [resolvable:$true] %s42
      %48 = dma.hbm_to_vmem [thread:$0]  %s41, 64, %s43, [#allocation6], 64, 64, 4
    $region9: #{tpu_custom_call.1} parent=1 // pred_fallthru
      _
    // Predicated region
    $region10: #{tpu_custom_call.1} parent=1 // pred_check
      _
    $region11: #{tpu_custom_call.1} parent=1 // pred_check_branch
      %50 = sbr.rel (0) target = $region13
    $region12: #{tpu_custom_call.1} parent=1 // pred_region
      %51 = dma.done [#allocation3], 256
    $region13: #{tpu_custom_call.1} parent=1 // pred_fallthru
      _
    // Predicated region
    $region14: #{tpu_custom_call.1} parent=1 // pred_check
      _
    $region15: #{tpu_custom_call.1} parent=1 // pred_check_branch
      %53 = sbr.rel (0) target = $region17
    $region16: #{tpu_custom_call.1} parent=1 // pred_region
      %54 = dma.done [#allocation6], 256
    $region17: #{tpu_custom_call.1} parent=1 // pred_fallthru
      _
    %s55 = sadd.s32 0, 0
    %p56 = scmp.lt.s32.totalorder %s55, 0
    %s57 = scalar_select %p56, %s55, 0
    %s58 = smul.u32 2, %s57
    %s59 = sadd.s32 0, 0
    %p60 = scmp.lt.s32.totalorder %s59, 0
    %s61 = scalar_select %p60, %s59, 0
    %s62 = smul.u32 2, %s61
    %p63 = scmp.eq.s32.totalorder 0, 0
    // Predicated region
    $region18: #{tpu_custom_call.1} parent=1 // pred_check
      %p64 = pneg %p63
    $region19: #{tpu_custom_call.1} parent=1 // pred_check_branch
      %66 = sbr.rel (%p64) target = $region21
    $region20: #{tpu_custom_call.1} parent=1 // pred_region
      %67 = vst [vmem:[#allocation7] sm:$0xff] 0.0
      %68 = vst [vmem:[#allocation8] sm:$0xff] 0.0
    $region21: #{tpu_custom_call.1} parent=1 // pred_fallthru
      _
    %s69 = sadd.s32 0, 0
    %s70 = smul.u32 %s69, 256
    %s71 = sadd.s32 %s70, 256
    %p72 = scmp.le.s32.totalorder %s71, 256
    // Predicated region
    $region22: #{tpu_custom_call.1} parent=1 // pred_check
      %p73 = pneg %p72
    $region23: #{tpu_custom_call.1} parent=1 // pred_check_branch
      %75 = sbr.rel (%p73) target = $region25
    $region24: #{tpu_custom_call.1} parent=1 // pred_region
      %v76 = vld [vmem:[#allocation2] sm:$0xf]
      %v77 = vld [vmem:[#allocation2 + $0x4] sm:$0xf]
      %v78 = vld [vmem:[#allocation2 + $0x8] sm:$0xf]
      %v79 = vld [vmem:[#allocation2 + $0xc] sm:$0xf]
      %v80 = vld [vmem:[#allocation5] sm:$0xf]
      %v81 = vld [vmem:[#allocation5 + $0x4] sm:$0xf]
      %v82 = vld [vmem:[#allocation5 + $0x8] sm:$0xf]
      %v83 = vld [vmem:[#allocation5 + $0xc] sm:$0xf]
      %v84 = vld [vmem:[#allocation7] sm:$0xff]
      %v85 = vmul.f32 %v76, %v80
      %v86 = vmul.f32 %v77, %v81
      %v87 = vmul.f32 %v78, %v82
      %v88 = vmul.f32 %v79, %v83
      %v93 = vcombine.low %v85, %v86
      %v94 = vcombine.low %v87, %v88
      %v96 = vunpack.c.l.s4 1983009808
      %v97 = vunpack.c.0.s8 %v96
      %v98 = vlaneseq
      %v99 = vshrl.u32 %v98, 7
      %v100 = vsub.s32 %v97, %v99
      %v101 = vrot.slane %v93, %v100
      %v103 = vunpack.c.l.s4 1983009808
      %v104 = vunpack.c.0.s8 %v103
      %v105 = vlaneseq
      %v106 = vshrl.u32 %v105, 7
      %v107 = vsub.s32 %v104, %v106
      %v108 = vrot.slane %v94, %v107
      %v109 = vcombine.low %v101, %v108
      %v110 = vcombine.high %v101, %v108
      %v113 = vadd.f32 %v109, %v110
      %114 = vadd.xlane.f32.xlu0 %v113
      %v115 = vpop.xlane.xlu0 %114
      %v116 = vadd.f32 %v84, %v115
      %117 = vst [vmem:[#allocation7] sm:$0xff] %v116
      %v118 = vld [vmem:[#allocation8] sm:$0xff]
      %v119 = vadd.f32 %v76, %v80
      %v120 = vadd.f32 %v77, %v81
      %v121 = vadd.f32 %v78, %v82
      %v122 = vadd.f32 %v79, %v83
      %v127 = vcombine.low %v119, %v120
      %v128 = vcombine.low %v121, %v122
      %v130 = vunpack.c.l.s4 1983009808
      %v131 = vunpack.c.0.s8 %v130
      %v132 = vlaneseq
      %v133 = vshrl.u32 %v132, 7
      %v134 = vsub.s32 %v131, %v133
      %v135 = vrot.slane %v127, %v134
      %v137 = vunpack.c.l.s4 1983009808
      %v138 = vunpack.c.0.s8 %v137
      %v139 = vlaneseq
      %v140 = vshrl.u32 %v139, 7
      %v141 = vsub.s32 %v138, %v140
      %v142 = vrot.slane %v128, %v141
      %v143 = vcombine.low %v135, %v142
      %v144 = vcombine.high %v135, %v142
      %v147 = vadd.f32 %v143, %v144
      %148 = vadd.xlane.f32.xlu0 %v147
      %v149 = vpop.xlane.xlu0 %148
      %v150 = vadd.f32 %v118, %v149
      %151 = vst [vmem:[#allocation8] sm:$0xff] %v150
    $region25: #{tpu_custom_call.1} parent=1 // pred_fallthru
      _
    %p152 = scmp.gt.s32.totalorder %s71, 256
    // Predicated region
    $region26: #{tpu_custom_call.1} parent=1 // pred_check
      %p153 = pneg %p152
    $region27: #{tpu_custom_call.1} parent=1 // pred_check_branch
      %155 = sbr.rel (%p153) target = $region29
    $region28: #{tpu_custom_call.1} parent=1 // pred_region
      %v156 = vlaneseq
      %v157 = vand.u32 %v156, 127
      %v158 = vadd.s32 %v157, 128
      %v159 = vstv %s70
      %v160 = vadd.s32 %v157, %v159
      %v161 = vadd.s32 %v158, %v159
      %vm162 = vcmp.lt.s32.totalorder %v160, 256
      %vm163 = vcmp.lt.s32.totalorder %v161, 256
      %v164 = vld [vmem:[#allocation2] sm:$0xf]
      %v165 = vld [vmem:[#allocation2 + $0x4] sm:$0xf]
      %v166 = vld [vmem:[#allocation2 + $0x8] sm:$0xf]
      %v167 = vld [vmem:[#allocation2 + $0xc] sm:$0xf]
      %v168 = vsel %vm162, 1, 0
      %v169 = vsel %vm163, 1, 0
      %vm170 = vcmp.eq.s32.totalorder %v168, 1
      %vm171 = vcmp.eq.s32.totalorder %v169, 1
      %v176 = vcombine.low %v164, %v165
      %v177 = vcombine.low %v166, %v167
      %v179 = vunpack.c.l.s4 1983009808
      %v180 = vunpack.c.0.s8 %v179
      %v181 = vlaneseq
      %v182 = vshrl.u32 %v181, 7
      %v183 = vsub.s32 %v180, %v182
      %v184 = vrot.slane %v176, %v183
      %v186 = vunpack.c.l.s4 1983009808
      %v187 = vunpack.c.0.s8 %v186
      %v188 = vlaneseq
      %v189 = vshrl.u32 %v188, 7
      %v190 = vsub.s32 %v187, %v189
      %v191 = vrot.slane %v177, %v190
      %v192 = vcombine.low %v184, %v191
      %v193 = vcombine.high %v184, %v191
      %v196 = vsel %vm170, %v192, 0.0
      %v197 = vsel %vm171, %v193, 0.0
      %v198 = vld [vmem:[#allocation5] sm:$0xf]
      %v199 = vld [vmem:[#allocation5 + $0x4] sm:$0xf]
      %v200 = vld [vmem:[#allocation5 + $0x8] sm:$0xf]
      %v201 = vld [vmem:[#allocation5 + $0xc] sm:$0xf]
      %v206 = vcombine.low %v198, %v199
      %v207 = vcombine.low %v200, %v201
      %v209 = vunpack.c.l.s4 1983009808
      %v210 = vunpack.c.0.s8 %v209
      %v211 = vlaneseq
      %v212 = vshrl.u32 %v211, 7
      %v213 = vsub.s32 %v210, %v212
      %v214 = vrot.slane %v206, %v213
      %v216 = vunpack.c.l.s4 1983009808
      %v217 = vunpack.c.0.s8 %v216
      %v218 = vlaneseq
      %v219 = vshrl.u32 %v218, 7
      %v220 = vsub.s32 %v217, %v219
      %v221 = vrot.slane %v207, %v220
      %v222 = vcombine.low %v214, %v221
      %v223 = vcombine.high %v214, %v221
      %v226 = vsel %vm170, %v222, 0.0
      %v227 = vsel %vm171, %v223, 0.0
      %v228 = vld [vmem:[#allocation7] sm:$0xff]
      %v229 = vmul.f32 %v196, %v226
      %v230 = vmul.f32 %v197, %v227
      %v231 = vadd.f32 %v229, %v230
      %232 = vadd.xlane.f32.xlu0 %v231
      %v233 = vpop.xlane.xlu0 %232
      %v234 = vadd.f32 %v228, %v233
      %235 = vst [vmem:[#allocation7] sm:$0xff] %v234
      %v236 = vld [vmem:[#allocation8] sm:$0xff]
      %v237 = vadd.f32 %v196, %v226
      %v238 = vadd.f32 %v197, %v227
      %v239 = vadd.f32 %v237, %v238
      %240 = vadd.xlane.f32.xlu0 %v239
      %v241 = vpop.xlane.xlu0 %240
      %v242 = vadd.f32 %v236, %v241
      %243 = vst [vmem:[#allocation8] sm:$0xff] %v242
    $region29: #{tpu_custom_call.1} parent=1 // pred_fallthru
      _
    // Predicated region
    $region30: #{tpu_custom_call.1} parent=1 // pred_check
      _
    $region31: #{tpu_custom_call.1} parent=1 // pred_check_branch
      %245 = sbr.rel (0) target = $region33
    $region32: #{tpu_custom_call.1} parent=1 // pred_region
      %s247 = ssub.s32 128, 128
      %248 = vsyncadd [#allocation4], %s247
      %s250 = sshll.u32 [#allocation7], 4
      %s251 = int_to_ptr.vmem [resolvable:$true] %s250
      %253 = dma.vmem_to_hbm [thread:$0]  %s251, 128, %s2, [#allocation4]
    $region33: #{tpu_custom_call.1} parent=1 // pred_fallthru
      _
    // Predicated region
    $region34: #{tpu_custom_call.1} parent=1 // pred_check
      _
    $region35: #{tpu_custom_call.1} parent=1 // pred_check_branch
      %255 = sbr.rel (0) target = $region37
    $region36: #{tpu_custom_call.1} parent=1 // pred_region
      %s257 = ssub.s32 128, 128
      %258 = vsyncadd [#allocation9], %s257
      %s260 = sshll.u32 [#allocation8], 4
      %s261 = int_to_ptr.vmem [resolvable:$true] %s260
      %263 = dma.vmem_to_hbm [thread:$0]  %s261, 128, %s3, [#allocation9]
    $region37: #{tpu_custom_call.1} parent=1 // pred_fallthru
      _
    // Predicated region
    $region38: #{tpu_custom_call.1} parent=1 // pred_check
      _
    $region39: #{tpu_custom_call.1} parent=1 // pred_check_branch
      %265 = sbr.rel (0) target = $region41
    $region40: #{tpu_custom_call.1} parent=1 // pred_region
      %266 = dma.done [#allocation4], 128
    $region41: #{tpu_custom_call.1} parent=1 // pred_fallthru
      _
    // Predicated region
    $region42: #{tpu_custom_call.1} parent=1 // pred_check
      _
    $region43: #{tpu_custom_call.1} parent=1 // pred_check_branch
      %268 = sbr.rel (0) target = $region45
    $region44: #{tpu_custom_call.1} parent=1 // pred_region
      %269 = dma.done [#allocation9], 128
    $region45: #{tpu_custom_call.1} parent=1 // pred_fallthru
      _
    %270 = vsyncpa [#allocation3], 1
    %271 = vsyncpa [#allocation6], 1
    %272 = vsyncpa [#allocation4], 1
    %273 = vsyncpa [#allocation9], 1

</llo_original>
